<compile_context>
chip_gen: v7x
topology: tpu7x:2x2x1
jax: 0.10.0
libtpu: 0.0.40
codegen_flags: <defaults>
</compile_context>

<pallas_src>
import math

import jax
import jax.numpy as jnp
from jax.experimental import pallas as pl
from jax.experimental.pallas import tpu as pltpu


def actor_mlp_kernel(x_ref,
                     w1_ref, b1_ref,
                     w2_ref, b2_ref,
                     w3_ref, b3_ref,
                     w4_ref, b4_ref,
                     o_ref):
    """Whole 4-layer MLP (fc -> tanh, x4) fused in one VMEM-resident body."""
    h = jnp.tanh(
        jnp.dot(x_ref[...], w1_ref[...], preferred_element_type=jnp.float32)
        + b1_ref[...])
    h = jnp.tanh(
        jnp.dot(h, w2_ref[...], preferred_element_type=jnp.float32)
        + b2_ref[...])
    h = jnp.tanh(
        jnp.dot(h, w3_ref[...], preferred_element_type=jnp.float32)
        + b3_ref[...])
    o_ref[...] = jnp.tanh(
        jnp.dot(h, w4_ref[...], preferred_element_type=jnp.float32)
        + b4_ref[...]).astype(o_ref.dtype)


def _layer_dims(params):
    return [(w.shape[0], w.shape[1]) for w, _ in params]


def _cost_estimate(batch, params, bytes_accessed):
    """Advisory cost for XLA's scheduler, using the REAL layer dims."""
    dims = _layer_dims(params)
    flops = 2 * batch * sum(fi * fo for fi, fo in dims)
    transcendentals = batch * sum(fo for _, fo in dims)
    return pl.CostEstimate(flops=flops,
                           transcendentals=transcendentals,
                           bytes_accessed=bytes_accessed)


def _flat_args(x, params):
    (w1, b1), (w2, b2), (w3, b3), (w4, b4) = params
    return (x, w1, b1, w2, b2, w3, b3, w4, b4)


def _forward_small(x, params):
    """Single-shot fused kernel: everything is one un-tiled VMEM block."""
    B, _ = x.shape
    out_dim = params[-1][0].shape[1]
    args = _flat_args(x, params)
    bytes_accessed = (sum(int(a.size) * a.dtype.itemsize for a in args)
                      + B * out_dim * 4)

    vmem = pl.BlockSpec(memory_space=pltpu.VMEM)
    return pl.pallas_call(
        actor_mlp_kernel,
        out_shape=jax.ShapeDtypeStruct((B, out_dim), jnp.float32),
        in_specs=[vmem] * 9,
        out_specs=vmem,
        cost_estimate=_cost_estimate(B, params, bytes_accessed),
    )(*args)


def _round_up(v, m):
    return ((v + m - 1) // m) * m


def _forward_tiled(x, params, tile_b=2048):
    """Batch-gridded path: double-buffered x/o tiles, resident weights.

    No host-side padding/slicing: Pallas handles the ragged last block (every
    row is computed independently; out-of-bounds output rows are masked).
    """
    B, in_dim = x.shape
    out_dim = params[-1][0].shape[1]

    # Clamp tile to the batch, keep it a multiple of 8 (sublane granularity).
    tile_b = max(8, min(_round_up(tile_b, 8), _round_up(B, 8)))
    steps = pl.cdiv(B, tile_b)
    # v7x has 2 TensorCores: keep the "parallel" batch axis evenly splittable.
    if steps > 1 and steps % 2 == 1:
        steps += 1
        tile_b = max(8, _round_up(pl.cdiv(B, steps), 8))
        steps = pl.cdiv(B, tile_b)

    args = _flat_args(x, params)
    weight_bytes = sum(int(a.size) * a.dtype.itemsize for a in args[1:])
    bytes_accessed = (int(x.size) * x.dtype.itemsize + weight_bytes
                      + B * out_dim * 4)

    # VMEM budget: double-buffered x / out tiles + resident weights + f32
    # intermediates ([tile_b, 128/64/16]); generous headroom, capped at 64 MiB
    # (v7x physical VMEM).
    hidden_cols = sum(fo for _, fo in _layer_dims(params)[:-1])
    vmem_bytes = (2 * tile_b * in_dim * 4
                  + 2 * tile_b * out_dim * 4
                  + weight_bytes
                  + tile_b * hidden_cols * 4)
    vmem_limit = int(min(max(4 * vmem_bytes, 16 * 1024 * 1024),
                         64 * 1024 * 1024))

    def const_spec(shape):
        return pl.BlockSpec(shape, lambda i: (0, 0))

    (w1, b1), (w2, b2), (w3, b3), (w4, b4) = params
    out = pl.pallas_call(
        actor_mlp_kernel,
        out_shape=jax.ShapeDtypeStruct((B, out_dim), jnp.float32),
        grid=(steps,),
        in_specs=[
            pl.BlockSpec((tile_b, in_dim), lambda i: (i, 0)),   # x: batch-tiled
            const_spec(w1.shape), const_spec(b1.shape),         # weights/biases
            const_spec(w2.shape), const_spec(b2.shape),         # stay resident
            const_spec(w3.shape), const_spec(b3.shape),         # across the grid
            const_spec(w4.shape), const_spec(b4.shape),
        ],
        # Output block last dim == full array dim (out_dim): no 128-padding,
        # no trailing slice, 16x less writeback than the padded variant.
        out_specs=pl.BlockSpec((tile_b, out_dim), lambda i: (i, 0)),
        compiler_params=pltpu.CompilerParams(
            dimension_semantics=("parallel",),     # megacore sharding on v7x
            vmem_limit_bytes=vmem_limit,
        ),
        cost_estimate=_cost_estimate(B, params, bytes_accessed),
    )(*args)
    return out


def actor_network_forward(x, params, *, tile_b=2048, grid_threshold=4096):
    """params = ((w1,b1),(w2,b2),(w3,b3),(w4,b4)); wi: [in,out], bi: [1,out]."""
    if x.shape[0] >= grid_threshold:
        return _forward_tiled(x, params, tile_b=tile_b)
    return _forward_small(x, params)


def kaiming_uniform(key, fan_in, fan_out):
    """Matches torch.nn.init.kaiming_uniform_ with default a=0 (as called in
    ActorNetwork.__init__): gain=sqrt(2), bound = sqrt(6/fan_in)."""
    bound = math.sqrt(2.0) * math.sqrt(3.0 / fan_in)
    # Stored as [in, out] (transposed PyTorch layout) for x @ W.
    return jax.random.uniform(key, (fan_in, fan_out), jnp.float32,
                              minval=-bound, maxval=bound)


def init_actor_params(key, input_dim, output_dim):
    """kaiming_uniform_ weights + zero biases, exactly as the PyTorch module."""
    dims = [(input_dim, 128), (128, 64), (64, 16), (16, output_dim)]
    keys = jax.random.split(key, len(dims))
    params = []
    for k, (fi, fo) in zip(keys, dims):
        w = kaiming_uniform(k, fi, fo)
        b = jnp.zeros((1, fo), jnp.float32)
        params.append((w, b))
    return tuple(params)


def actor_network_ref(x, params):
    h = x
    for w, b in params:
        h = jnp.tanh(h @ w + b)
    return h


if __name__ == "__main__":
    key = jax.random.PRNGKey(0)
    k_param, k_x_small, k_x_big = jax.random.split(key, 3)

    batch, input_dim, output_dim = 8, 32, 8
    params = init_actor_params(k_param, input_dim, output_dim)

    # --- small-batch path: single fused invocation, no grid -----------------
    x_small = jax.random.normal(k_x_small, (batch, input_dim), jnp.float32)
    out_small = jax.block_until_ready(actor_network_forward(x_small, params))
    ref_small = actor_network_ref(x_small, params)
    assert out_small.shape == (batch, output_dim)
    assert jnp.allclose(out_small, ref_small, atol=1e-5, rtol=1e-5), \
        "small-batch mismatch vs reference"

    # --- tiled path: batch grid, ragged last block, unpadded output ---------
    # Small tile_b / threshold here purely to exercise the gridded path on a
    # modest batch (B=1500, tile=256 -> 6 even grid steps, last block ragged).
    big_batch = 1500
    x_big = jax.random.normal(k_x_big, (big_batch, input_dim), jnp.float32)
    out_big = jax.block_until_ready(
        actor_network_forward(x_big, params, tile_b=256, grid_threshold=512))
    ref_big = actor_network_ref(x_big, params)
    assert out_big.shape == (big_batch, output_dim)
    assert jnp.allclose(out_big, ref_big, atol=1e-5, rtol=1e-5), \
        "large-batch mismatch vs reference"

    print("KERNEL_OK")
</pallas_src>

<mosaic_0001>
module attributes {stable_mosaic.version = 11 : i64} {
  func.func @actor_mlp_kernel(%arg0: memref<8x32xf32, #tpu.memory_space<vmem>>, %arg1: memref<32x128xf32, #tpu.memory_space<vmem>>, %arg2: memref<1x128xf32, #tpu.memory_space<vmem>>, %arg3: memref<128x64xf32, #tpu.memory_space<vmem>>, %arg4: memref<1x64xf32, #tpu.memory_space<vmem>>, %arg5: memref<64x16xf32, #tpu.memory_space<vmem>>, %arg6: memref<1x16xf32, #tpu.memory_space<vmem>>, %arg7: memref<16x8xf32, #tpu.memory_space<vmem>>, %arg8: memref<1x8xf32, #tpu.memory_space<vmem>>, %arg9: memref<8x8xf32, #tpu.memory_space<vmem>>) attributes {dimension_semantics = [], scalar_prefetch = 0 : i64, scratch_operands = 0 : i64, tpu.core_type = #tpu.core_type<tc>} {
    %c0 = arith.constant 0 : index
    %c0_0 = arith.constant 0 : index
    %0 = vector.load %arg0[%c0, %c0_0] : memref<8x32xf32, #tpu.memory_space<vmem>>, vector<8x32xf32>
    %c0_1 = arith.constant 0 : index
    %c0_2 = arith.constant 0 : index
    %1 = vector.load %arg1[%c0_1, %c0_2] : memref<32x128xf32, #tpu.memory_space<vmem>>, vector<32x128xf32>
    %cst = arith.constant dense<0.000000e+00> : vector<8x128xf32>
    %2 = tpu.matmul %0, %1, %cst {dimension_numbers = #tpu.dot_dimension_numbers<[1], [0], [0], [1], [0, 0, 1, 1], [], []>} : vector<8x32xf32>, vector<32x128xf32>, vector<8x128xf32> -> vector<8x128xf32>
    %c0_3 = arith.constant 0 : index
    %c0_4 = arith.constant 0 : index
    %3 = vector.load %arg2[%c0_3, %c0_4] : memref<1x128xf32, #tpu.memory_space<vmem>>, vector<1x128xf32>
    %4 = vector.broadcast %3 : vector<1x128xf32> to vector<8x128xf32>
    %5 = arith.addf %2, %4 : vector<8x128xf32>
    %6 = math.tanh %5 : vector<8x128xf32>
    %c0_5 = arith.constant 0 : index
    %c0_6 = arith.constant 0 : index
    %7 = vector.load %arg3[%c0_5, %c0_6] : memref<128x64xf32, #tpu.memory_space<vmem>>, vector<128x64xf32>
    %cst_7 = arith.constant dense<0.000000e+00> : vector<8x64xf32>
    %8 = tpu.matmul %6, %7, %cst_7 {dimension_numbers = #tpu.dot_dimension_numbers<[1], [0], [0], [1], [0, 0, 1, 1], [], []>} : vector<8x128xf32>, vector<128x64xf32>, vector<8x64xf32> -> vector<8x64xf32>
    %c0_8 = arith.constant 0 : index
    %c0_9 = arith.constant 0 : index
    %9 = vector.load %arg4[%c0_8, %c0_9] : memref<1x64xf32, #tpu.memory_space<vmem>>, vector<1x64xf32>
    %10 = vector.broadcast %9 : vector<1x64xf32> to vector<8x64xf32>
    %11 = arith.addf %8, %10 : vector<8x64xf32>
    %12 = math.tanh %11 : vector<8x64xf32>
    %c0_10 = arith.constant 0 : index
    %c0_11 = arith.constant 0 : index
    %13 = vector.load %arg5[%c0_10, %c0_11] : memref<64x16xf32, #tpu.memory_space<vmem>>, vector<64x16xf32>
    %cst_12 = arith.constant dense<0.000000e+00> : vector<8x16xf32>
    %14 = tpu.matmul %12, %13, %cst_12 {dimension_numbers = #tpu.dot_dimension_numbers<[1], [0], [0], [1], [0, 0, 1, 1], [], []>} : vector<8x64xf32>, vector<64x16xf32>, vector<8x16xf32> -> vector<8x16xf32>
    %c0_13 = arith.constant 0 : index
    %c0_14 = arith.constant 0 : index
    %15 = vector.load %arg6[%c0_13, %c0_14] : memref<1x16xf32, #tpu.memory_space<vmem>>, vector<1x16xf32>
    %16 = vector.broadcast %15 : vector<1x16xf32> to vector<8x16xf32>
    %17 = arith.addf %14, %16 : vector<8x16xf32>
    %18 = math.tanh %17 : vector<8x16xf32>
    %c0_15 = arith.constant 0 : index
    %c0_16 = arith.constant 0 : index
    %19 = vector.load %arg7[%c0_15, %c0_16] : memref<16x8xf32, #tpu.memory_space<vmem>>, vector<16x8xf32>
    %cst_17 = arith.constant dense<0.000000e+00> : vector<8x8xf32>
    %20 = tpu.matmul %18, %19, %cst_17 {dimension_numbers = #tpu.dot_dimension_numbers<[1], [0], [0], [1], [0, 0, 1, 1], [], []>} : vector<8x16xf32>, vector<16x8xf32>, vector<8x8xf32> -> vector<8x8xf32>
    %c0_18 = arith.constant 0 : index
    %c0_19 = arith.constant 0 : index
    %21 = vector.load %arg8[%c0_18, %c0_19] : memref<1x8xf32, #tpu.memory_space<vmem>>, vector<1x8xf32>
    %22 = vector.broadcast %21 : vector<1x8xf32> to vector<8x8xf32>
    %23 = arith.addf %20, %22 : vector<8x8xf32>
    %24 = math.tanh %23 : vector<8x8xf32>
    %c0_20 = arith.constant 0 : index
    %c0_21 = arith.constant 0 : index
    %25 = vector.load %arg9[%c0_20, %c0_21] : memref<8x8xf32, #tpu.memory_space<vmem>>, vector<8x8xf32>
    tpu.vector_store %arg9[%c0_20, %c0_21], %24 {strides = array<i32>} : memref<8x8xf32, #tpu.memory_space<vmem>>, vector<8x8xf32>,
    return
  }
}

</mosaic_0001>

<llo_original>
// kernel: tpu_custom_call.1
$region0: #{tpu_custom_call.1}
  #allocation0 [shape = 'u32[]', space=smem, size = 0x4, offset = 0x4, fixed_abs, tag = 'smem constant byte address 0x4 - core index']
  #allocation1 [shape = 'u32[144,128]{1,0:T(1,128)}', space=vmem, size = 0x12000, scoped, tag = 'internal scratch']
  %s0 = inlined_call_operand.vmem [shape: f32[8,32], index: 0, kind: input, shape index: {}]
  %s1 = inlined_call_operand.vmem [shape: f32[32,128], index: 1, kind: input, shape index: {}]
  %s2 = inlined_call_operand.vmem [shape: f32[1,128], index: 2, kind: input, shape index: {}]
  %s3 = inlined_call_operand.vmem [shape: f32[128,64], index: 3, kind: input, shape index: {}]
  %s4 = inlined_call_operand.vmem [shape: f32[1,64], index: 4, kind: input, shape index: {}]
  %s5 = inlined_call_operand.vmem [shape: f32[64,16], index: 5, kind: input, shape index: {}]
  %s6 = inlined_call_operand.vmem [shape: f32[1,16], index: 6, kind: input, shape index: {}]
  %s7 = inlined_call_operand.vmem [shape: f32[16,8], index: 7, kind: input, shape index: {}]
  %s8 = inlined_call_operand.vmem [shape: f32[1,8], index: 8, kind: input, shape index: {}]
  %s9 = inlined_call_operand.hbm [shape: f32[8,8], index: 9, kind: output, shape index: {}]
  %s10 = sld [smem:[#allocation0]]
  $region46: #{tpu_custom_call.1} parent=0
    _
  %s12 = ssub.s32 1, %s10
  %s13 = scalar_select 0, %s12, %s10
  $region1: #{tpu_custom_call.1} parent=0
    #allocation2 [shape = 'u8[4096]{0}', space=vmem, size = 0x1000, scoped, tag = 'output window, operand 0, single buffered']
    #allocation3 [shape = 's32[1]{0}', space=sflag, size = 0x4, scoped, tag = 'scoped memory for tpu_custom_call.1']
    %14 = vsyncpa [#allocation3], 0
    // Predicated region
    $region2: #{tpu_custom_call.1} parent=1 // pred_check
      _
    $region3: #{tpu_custom_call.1} parent=1 // pred_check_branch
      %16 = sbr.rel (0) target = $region5
    $region4: #{tpu_custom_call.1} parent=1 // pred_region
      _
    $region5: #{tpu_custom_call.1} parent=1 // pred_fallthru
      _
    // Predicated region
    $region6: #{tpu_custom_call.1} parent=1 // pred_check
      _
    $region7: #{tpu_custom_call.1} parent=1 // pred_check_branch
      %18 = sbr.rel (0) target = $region9
    $region8: #{tpu_custom_call.1} parent=1 // pred_region
      _
    $region9: #{tpu_custom_call.1} parent=1 // pred_fallthru
      _
    // Predicated region
    $region10: #{tpu_custom_call.1} parent=1 // pred_check
      _
    $region11: #{tpu_custom_call.1} parent=1 // pred_check_branch
      %20 = sbr.rel (0) target = $region13
    $region12: #{tpu_custom_call.1} parent=1 // pred_region
      _
    $region13: #{tpu_custom_call.1} parent=1 // pred_fallthru
      _
    // Predicated region
    $region14: #{tpu_custom_call.1} parent=1 // pred_check
      _
    $region15: #{tpu_custom_call.1} parent=1 // pred_check_branch
      %22 = sbr.rel (0) target = $region17
    $region16: #{tpu_custom_call.1} parent=1 // pred_region
      _
    $region17: #{tpu_custom_call.1} parent=1 // pred_fallthru
      _
    // Predicated region
    $region18: #{tpu_custom_call.1} parent=1 // pred_check
      _
    $region19: #{tpu_custom_call.1} parent=1 // pred_check_branch
      %24 = sbr.rel (0) target = $region21
    $region20: #{tpu_custom_call.1} parent=1 // pred_region
      _
    $region21: #{tpu_custom_call.1} parent=1 // pred_fallthru
      _
    // Predicated region
    $region22: #{tpu_custom_call.1} parent=1 // pred_check
      _
    $region23: #{tpu_custom_call.1} parent=1 // pred_check_branch
      %26 = sbr.rel (0) target = $region25
    $region24: #{tpu_custom_call.1} parent=1 // pred_region
      _
    $region25: #{tpu_custom_call.1} parent=1 // pred_fallthru
      _
    // Predicated region
    $region26: #{tpu_custom_call.1} parent=1 // pred_check
      _
    $region27: #{tpu_custom_call.1} parent=1 // pred_check_branch
      %28 = sbr.rel (0) target = $region29
    $region28: #{tpu_custom_call.1} parent=1 // pred_region
      _
    $region29: #{tpu_custom_call.1} parent=1 // pred_fallthru
      _
    // Predicated region
    $region30: #{tpu_custom_call.1} parent=1 // pred_check
      _
    $region31: #{tpu_custom_call.1} parent=1 // pred_check_branch
      %30 = sbr.rel (0) target = $region33
    $region32: #{tpu_custom_call.1} parent=1 // pred_region
      _
    $region33: #{tpu_custom_call.1} parent=1 // pred_fallthru
      _
    // Predicated region
    $region34: #{tpu_custom_call.1} parent=1 // pred_check
      _
    $region35: #{tpu_custom_call.1} parent=1 // pred_check_branch
      %32 = sbr.rel (0) target = $region37
    $region36: #{tpu_custom_call.1} parent=1 // pred_region
      _
    $region37: #{tpu_custom_call.1} parent=1 // pred_fallthru
      _
    %v33 = vld [vmem:[%s0] sm:$0xff]
    %v34 = vld [vmem:[%s1] sm:$0xff]
    %v35 = vld [vmem:[%s1 + $0x8] sm:$0xff]
    %v36 = vld [vmem:[%s1 + $0x10] sm:$0xff]
    %v37 = vld [vmem:[%s1 + $0x18] sm:$0xff]
    %v38 = vld [vmem:[%s2] sm:$0x1]
    %v40 = vlaneseq
    %v41 = vshrl.u32 %v40, 7
    %v42 = vsub.s32 0, %v41
    %v43 = vrot.slane %v38, %v42
    %vm45 = vcmask 261120
    %v47 = vsel %vm45, %v33, 0
    %49 = vmatprep.subr.mxu0 0.0
    %50 = vmatpush1.msra.mxu0 %v34
    %51 = vmatprep.subr.mxu0 0.0
    %52 = vmatpush1.msra.mxu0 %v35
    %53 = vmatprep.subr.mxu0 0.0
    %54 = vmatpush1.msra.mxu0 %v36
    %55 = vmatprep.subr.mxu0 0.0
    %56 = vmatpush1.msra.mxu0 %v37
    %57 = vmatprep.subr.mxu0 0.0
    %58 = vmatpush1.msra.mxu0 0.0
    %59 = vmatprep.subr.mxu0 0.0
    %60 = vmatpush1.msra.mxu0 0.0
    %61 = vmatprep.subr.mxu0 0.0
    %62 = vmatpush1.msra.mxu0 0.0
    %63 = vmatprep.subr.mxu0 0.0
    %64 = vmatpush1.msra.mxu0 0.0
    %65 = vmatprep.subr.mxu0 0.0
    %66 = vmatpush1.msra.mxu0 0.0
    %67 = vmatprep.subr.mxu0 0.0
    %68 = vmatpush1.msra.mxu0 0.0
    %69 = vmatprep.subr.mxu0 0.0
    %70 = vmatpush1.msra.mxu0 0.0
    %71 = vmatprep.subr.mxu0 0.0
    %72 = vmatpush1.msra.mxu0 0.0
    %73 = vmatprep.subr.mxu0 0.0
    %74 = vmatpush1.msra.mxu0 0.0
    %75 = vmatprep.subr.mxu0 0.0
    %76 = vmatpush1.msra.mxu0 0.0
    %77 = vmatprep.subr.mxu0 0.0
    %78 = vmatpush1.msra.mxu0 0.0
    %79 = vmatprep.subr.mxu0 0.0
    %80 = vmatpush1.msra.mxu0 0.0
    %81 = vmatprep.subr.mxu0 0.0
    %82 = vmatpush1.msra.mxu0 0.0
    %83 = vmatprep.subr.mxu0 0.0
    %84 = vmatpush1.msra.mxu0 0.0
    %85 = vmatprep.subr.mxu0 0.0
    %86 = vmatpush1.msra.mxu0 0.0
    %87 = vmatprep.subr.mxu0 0.0
    %88 = vmatpush1.msra.mxu0 0.0
    %89 = vmatprep.subr.mxu0 0.0
    %90 = vmatpush1.msra.mxu0 0.0
    %91 = vmatprep.subr.mxu0 0.0
    %92 = vmatpush1.msra.mxu0 0.0
    %93 = vmatprep.subr.mxu0 0.0
    %94 = vmatpush1.msra.mxu0 0.0
    %95 = vmatprep.subr.mxu0 0.0
    %96 = vmatpush1.msra.mxu0 0.0
    %97 = vmatprep.subr.mxu0 0.0
    %98 = vmatpush1.msra.mxu0 0.0
    %99 = vmatprep.subr.mxu0 0.0
    %100 = vmatpush1.msra.mxu0 0.0
    %101 = vmatprep.subr.mxu0 0.0
    %102 = vmatpush1.msra.mxu0 0.0
    %103 = vmatprep.subr.mxu0 0.0
    %104 = vmatpush1.msra.mxu0 0.0
    %105 = vmatprep.subr.mxu0 0.0
    %106 = vmatpush1.msra.mxu0 0.0
    %107 = vmatprep.subr.mxu0 0.0
    %108 = vmatpush1.msra.mxu0 0.0
    %109 = vmatprep.subr.mxu0 0.0
    %110 = vmatpush1.msra.mxu0 0.0
    %111 = vmatprep.subr.mxu0 0.0
    %112 = vmatpush1.msra.mxu0 0.0
    %113 = vmatprep.mubr.f32.mxu0 0.0
    %114 = vmatmul.mubr.f32.gmra.mrb[0].mxu0 %v47
    %v115 = vpop.f32.mrb[0].mxu0
    %v116 = vadd.f32 %v43, %v115
    %v117 = vpop.f32.mrb[0].mxu0
    %118 = vdwg.mxu0
    %v119 = vtanh.pop %v116
    %v120 = vld [vmem:[%s3] sm:$0xff]
    %v121 = vld [vmem:[%s3 + $0x8] sm:$0xff]
    %v122 = vld [vmem:[%s3 + $0x10] sm:$0xff]
    %v123 = vld [vmem:[%s3 + $0x18] sm:$0xff]
    %v124 = vld [vmem:[%s3 + $0x20] sm:$0xff]
    %v125 = vld [vmem:[%s3 + $0x28] sm:$0xff]
    %v126 = vld [vmem:[%s3 + $0x30] sm:$0xff]
    %v127 = vld [vmem:[%s3 + $0x38] sm:$0xff]
    %v128 = vld [vmem:[%s3 + $0x40] sm:$0xff]
    %v129 = vld [vmem:[%s3 + $0x48] sm:$0xff]
    %v130 = vld [vmem:[%s3 + $0x50] sm:$0xff]
    %v131 = vld [vmem:[%s3 + $0x58] sm:$0xff]
    %v132 = vld [vmem:[%s3 + $0x60] sm:$0xff]
    %v133 = vld [vmem:[%s3 + $0x68] sm:$0xff]
    %v134 = vld [vmem:[%s3 + $0x70] sm:$0xff]
    %v135 = vld [vmem:[%s3 + $0x78] sm:$0xff]
    %v136 = vld [vmem:[%s4] sm:$0x1]
    %v138 = vlaneseq
    %v139 = vshrl.u32 %v138, 7
    %v140 = vsub.s32 0, %v139
    %v141 = vrot.slane %v136, %v140
    %143 = vmatprep.subr.mxu0 0.0
    %144 = vmatpush1.msra.mxu0 %v120
    %145 = vmatprep.subr.mxu0 0.0
    %146 = vmatpush1.msra.mxu0 %v121
    %147 = vmatprep.subr.mxu0 0.0
    %148 = vmatpush1.msra.mxu0 %v122
    %149 = vmatprep.subr.mxu0 0.0
    %150 = vmatpush1.msra.mxu0 %v123
    %151 = vmatprep.subr.mxu0 0.0
    %152 = vmatpush1.msra.mxu0 %v124
    %153 = vmatprep.subr.mxu0 0.0
    %154 = vmatpush1.msra.mxu0 %v125
    %155 = vmatprep.subr.mxu0 0.0
    %156 = vmatpush1.msra.mxu0 %v126
    %157 = vmatprep.subr.mxu0 0.0
    %158 = vmatpush1.msra.mxu0 %v127
    %159 = vmatprep.subr.mxu0 0.0
    %160 = vmatpush1.msra.mxu0 %v128
    %161 = vmatprep.subr.mxu0 0.0
    %162 = vmatpush1.msra.mxu0 %v129
    %163 = vmatprep.subr.mxu0 0.0
    %164 = vmatpush1.msra.mxu0 %v130
    %165 = vmatprep.subr.mxu0 0.0
    %166 = vmatpush1.msra.mxu0 %v131
    %167 = vmatprep.subr.mxu0 0.0
    %168 = vmatpush1.msra.mxu0 %v132
    %169 = vmatprep.subr.mxu0 0.0
    %170 = vmatpush1.msra.mxu0 %v133
    %171 = vmatprep.subr.mxu0 0.0
    %172 = vmatpush1.msra.mxu0 %v134
    %173 = vmatprep.subr.mxu0 0.0
    %174 = vmatpush1.msra.mxu0 %v135
    %175 = vmatprep.subr.mxu0 0.0
    %176 = vmatpush1.msra.mxu0 0.0
    %177 = vmatprep.subr.mxu0 0.0
    %178 = vmatpush1.msra.mxu0 0.0
    %179 = vmatprep.subr.mxu0 0.0
    %180 = vmatpush1.msra.mxu0 0.0
    %181 = vmatprep.subr.mxu0 0.0
    %182 = vmatpush1.msra.mxu0 0.0
    %183 = vmatprep.subr.mxu0 0.0
    %184 = vmatpush1.msra.mxu0 0.0
    %185 = vmatprep.subr.mxu0 0.0
    %186 = vmatpush1.msra.mxu0 0.0
    %187 = vmatprep.subr.mxu0 0.0
    %188 = vmatpush1.msra.mxu0 0.0
    %189 = vmatprep.subr.mxu0 0.0
    %190 = vmatpush1.msra.mxu0 0.0
    %191 = vmatprep.subr.mxu0 0.0
    %192 = vmatpush1.msra.mxu0 0.0
    %193 = vmatprep.subr.mxu0 0.0
    %194 = vmatpush1.msra.mxu0 0.0
    %195 = vmatprep.subr.mxu0 0.0
    %196 = vmatpush1.msra.mxu0 0.0
    %197 = vmatprep.subr.mxu0 0.0
    %198 = vmatpush1.msra.mxu0 0.0
    %199 = vmatprep.subr.mxu0 0.0
    %200 = vmatpush1.msra.mxu0 0.0
    %201 = vmatprep.subr.mxu0 0.0
    %202 = vmatpush1.msra.mxu0 0.0
    %203 = vmatprep.subr.mxu0 0.0
    %204 = vmatpush1.msra.mxu0 0.0
    %205 = vmatprep.subr.mxu0 0.0
    %206 = vmatpush1.msra.mxu0 0.0
    %207 = vmatprep.mubr.f32.mxu0 0.0
    %208 = vmatmul.mubr.f32.gmra.mrb[0].mxu0 %v119
    %v209 = vpop.f32.mrb[0].mxu0
    %v210 = vadd.f32 %v141, %v209
    %v211 = vpop.f32.mrb[0].mxu0
    %212 = vdwg.mxu0
    %v213 = vtanh.pop %v210
    %v214 = vld [vmem:[%s5] sm:$0xff]
    %v215 = vld [vmem:[%s5 + $0x8] sm:$0xff]
    %v216 = vld [vmem:[%s5 + $0x10] sm:$0xff]
    %v217 = vld [vmem:[%s5 + $0x18] sm:$0xff]
    %v218 = vld [vmem:[%s5 + $0x20] sm:$0xff]
    %v219 = vld [vmem:[%s5 + $0x28] sm:$0xff]
    %v220 = vld [vmem:[%s5 + $0x30] sm:$0xff]
    %v221 = vld [vmem:[%s5 + $0x38] sm:$0xff]
    %v222 = vld [vmem:[%s6] sm:$0x1]
    %v224 = vlaneseq
    %v225 = vshrl.u32 %v224, 7
    %v226 = vsub.s32 0, %v225
    %v227 = vrot.slane %v222, %v226
    %vm229 = vcmask 523264
    %v231 = vsel %vm229, %v213, 0
    %233 = vmatprep.subr.mxu0 0.0
    %234 = vmatpush1.msra.mxu0 %v214
    %235 = vmatprep.subr.mxu0 0.0
    %236 = vmatpush1.msra.mxu0 %v215
    %237 = vmatprep.subr.mxu0 0.0
    %238 = vmatpush1.msra.mxu0 %v216
    %239 = vmatprep.subr.mxu0 0.0
    %240 = vmatpush1.msra.mxu0 %v217
    %241 = vmatprep.subr.mxu0 0.0
    %242 = vmatpush1.msra.mxu0 %v218
    %243 = vmatprep.subr.mxu0 0.0
    %244 = vmatpush1.msra.mxu0 %v219
    %245 = vmatprep.subr.mxu0 0.0
    %246 = vmatpush1.msra.mxu0 %v220
    %247 = vmatprep.subr.mxu0 0.0
    %248 = vmatpush1.msra.mxu0 %v221
    %249 = vmatprep.subr.mxu0 0.0
    %250 = vmatpush1.msra.mxu0 0.0
    %251 = vmatprep.subr.mxu0 0.0
    %252 = vmatpush1.msra.mxu0 0.0
    %253 = vmatprep.subr.mxu0 0.0
    %254 = vmatpush1.msra.mxu0 0.0
    %255 = vmatprep.subr.mxu0 0.0
    %256 = vmatpush1.msra.mxu0 0.0
    %257 = vmatprep.subr.mxu0 0.0
    %258 = vmatpush1.msra.mxu0 0.0
    %259 = vmatprep.subr.mxu0 0.0
    %260 = vmatpush1.msra.mxu0 0.0
    %261 = vmatprep.subr.mxu0 0.0
    %262 = vmatpush1.msra.mxu0 0.0
    %263 = vmatprep.subr.mxu0 0.0
    %264 = vmatpush1.msra.mxu0 0.0
    %265 = vmatprep.subr.mxu0 0.0
    %266 = vmatpush1.msra.mxu0 0.0
    %267 = vmatprep.subr.mxu0 0.0
    %268 = vmatpush1.msra.mxu0 0.0
    %269 = vmatprep.subr.mxu0 0.0
    %270 = vmatpush1.msra.mxu0 0.0
    %271 = vmatprep.subr.mxu0 0.0
    %272 = vmatpush1.msra.mxu0 0.0
    %273 = vmatprep.subr.mxu0 0.0
    %274 = vmatpush1.msra.mxu0 0.0
    %275 = vmatprep.subr.mxu0 0.0
    %276 = vmatpush1.msra.mxu0 0.0
    %277 = vmatprep.subr.mxu0 0.0
    %278 = vmatpush1.msra.mxu0 0.0
    %279 = vmatprep.subr.mxu0 0.0
    %280 = vmatpush1.msra.mxu0 0.0
    %281 = vmatprep.subr.mxu0 0.0
    %282 = vmatpush1.msra.mxu0 0.0
    %283 = vmatprep.subr.mxu0 0.0
    %284 = vmatpush1.msra.mxu0 0.0
    %285 = vmatprep.subr.mxu0 0.0
    %286 = vmatpush1.msra.mxu0 0.0
    %287 = vmatprep.subr.mxu0 0.0
    %288 = vmatpush1.msra.mxu0 0.0
    %289 = vmatprep.subr.mxu0 0.0
    %290 = vmatpush1.msra.mxu0 0.0
    %291 = vmatprep.subr.mxu0 0.0
    %292 = vmatpush1.msra.mxu0 0.0
    %293 = vmatprep.subr.mxu0 0.0
    %294 = vmatpush1.msra.mxu0 0.0
    %295 = vmatprep.subr.mxu0 0.0
    %296 = vmatpush1.msra.mxu0 0.0
    %297 = vmatprep.mubr.f32.mxu0 0.0
    %298 = vmatmul.mubr.f32.gmra.mrb[0].mxu0 %v231
    %v299 = vpop.f32.mrb[0].mxu0
    %v300 = vadd.f32 %v227, %v299
    %v301 = vpop.f32.mrb[0].mxu0
    %302 = vdwg.mxu0
    %v303 = vtanh.pop %v300
    %v304 = vld [vmem:[%s7] sm:$0xff]
    %v305 = vld [vmem:[%s7 + $0x8] sm:$0xff]
    %v306 = vld [vmem:[%s8] sm:$0x1]
    %v308 = vlaneseq
    %v309 = vshrl.u32 %v308, 7
    %v310 = vsub.s32 0, %v309
    %v311 = vrot.slane %v306, %v310
    %vm313 = vcmask 130048
    %v315 = vsel %vm313, %v303, 0
    %317 = vmatprep.subr.mxu0 0.0
    %318 = vmatpush1.msra.mxu0 %v304
    %319 = vmatprep.subr.mxu0 0.0
    %320 = vmatpush1.msra.mxu0 %v305
    %321 = vmatprep.subr.mxu0 0.0
    %322 = vmatpush1.msra.mxu0 0.0
    %323 = vmatprep.subr.mxu0 0.0
    %324 = vmatpush1.msra.mxu0 0.0
    %325 = vmatprep.subr.mxu0 0.0
    %326 = vmatpush1.msra.mxu0 0.0
    %327 = vmatprep.subr.mxu0 0.0
    %328 = vmatpush1.msra.mxu0 0.0
    %329 = vmatprep.subr.mxu0 0.0
    %330 = vmatpush1.msra.mxu0 0.0
    %331 = vmatprep.subr.mxu0 0.0
    %332 = vmatpush1.msra.mxu0 0.0
    %333 = vmatprep.subr.mxu0 0.0
    %334 = vmatpush1.msra.mxu0 0.0
    %335 = vmatprep.subr.mxu0 0.0
    %336 = vmatpush1.msra.mxu0 0.0
    %337 = vmatprep.subr.mxu0 0.0
    %338 = vmatpush1.msra.mxu0 0.0
    %339 = vmatprep.subr.mxu0 0.0
    %340 = vmatpush1.msra.mxu0 0.0
    %341 = vmatprep.subr.mxu0 0.0
    %342 = vmatpush1.msra.mxu0 0.0
    %343 = vmatprep.subr.mxu0 0.0
    %344 = vmatpush1.msra.mxu0 0.0
    %345 = vmatprep.subr.mxu0 0.0
    %346 = vmatpush1.msra.mxu0 0.0
    %347 = vmatprep.subr.mxu0 0.0
    %348 = vmatpush1.msra.mxu0 0.0
    %349 = vmatprep.subr.mxu0 0.0
    %350 = vmatpush1.msra.mxu0 0.0
    %351 = vmatprep.subr.mxu0 0.0
    %352 = vmatpush1.msra.mxu0 0.0
    %353 = vmatprep.subr.mxu0 0.0
    %354 = vmatpush1.msra.mxu0 0.0
    %355 = vmatprep.subr.mxu0 0.0
    %356 = vmatpush1.msra.mxu0 0.0
    %357 = vmatprep.subr.mxu0 0.0
    %358 = vmatpush1.msra.mxu0 0.0
    %359 = vmatprep.subr.mxu0 0.0
    %360 = vmatpush1.msra.mxu0 0.0
    %361 = vmatprep.subr.mxu0 0.0
    %362 = vmatpush1.msra.mxu0 0.0
    %363 = vmatprep.subr.mxu0 0.0
    %364 = vmatpush1.msra.mxu0 0.0
    %365 = vmatprep.subr.mxu0 0.0
    %366 = vmatpush1.msra.mxu0 0.0
    %367 = vmatprep.subr.mxu0 0.0
    %368 = vmatpush1.msra.mxu0 0.0
    %369 = vmatprep.subr.mxu0 0.0
    %370 = vmatpush1.msra.mxu0 0.0
    %371 = vmatprep.subr.mxu0 0.0
    %372 = vmatpush1.msra.mxu0 0.0
    %373 = vmatprep.subr.mxu0 0.0
    %374 = vmatpush1.msra.mxu0 0.0
    %375 = vmatprep.subr.mxu0 0.0
    %376 = vmatpush1.msra.mxu0 0.0
    %377 = vmatprep.subr.mxu0 0.0
    %378 = vmatpush1.msra.mxu0 0.0
    %379 = vmatprep.subr.mxu0 0.0
    %380 = vmatpush1.msra.mxu0 0.0
    %381 = vmatprep.mubr.f32.mxu0 0.0
    %382 = vmatmul.mubr.f32.gmra.mrb[0].mxu0 %v315
    %v383 = vpop.f32.mrb[0].mxu0
    %v384 = vadd.f32 %v311, %v383
    %v385 = vpop.f32.mrb[0].mxu0
    %386 = vdwg.mxu0
    %v387 = vtanh.pop %v384
    %vm388 = vcmask 64512
    %389 = vst.msk [vmem:[#allocation2] sm:$0xff] %vm388, %v387
    // Predicated region
    $region38: #{tpu_custom_call.1} parent=1 // pred_check
      _
    $region39: #{tpu_custom_call.1} parent=1 // pred_check_branch
      %391 = sbr.rel (0) target = $region41
    $region40: #{tpu_custom_call.1} parent=1 // pred_region
      %s393 = ssub.s32 128, 128
      %394 = vsyncadd [#allocation3], %s393
      %s396 = sshll.u32 [#allocation2], 4
      %s397 = int_to_ptr.vmem [resolvable:$true] %s396
      %399 = dma.vmem_to_hbm [thread:$0]  %s397, 128, %s9, [#allocation3]
    $region41: #{tpu_custom_call.1} parent=1 // pred_fallthru
      _
    // Predicated region
    $region42: #{tpu_custom_call.1} parent=1 // pred_check
      _
    $region43: #{tpu_custom_call.1} parent=1 // pred_check_branch
      %401 = sbr.rel (0) target = $region45
    $region44: #{tpu_custom_call.1} parent=1 // pred_region
      %402 = dma.done [#allocation3], 128
    $region45: #{tpu_custom_call.1} parent=1 // pred_fallthru
      _
    %403 = vsyncpa [#allocation3], 1

</llo_original>
